<compile_context>
chip_gen: v7x
topology: tpu7x:2x2x1
jax: 0.10.0
libtpu: 0.0.40
codegen_flags: <defaults>
</compile_context>

<pallas_src>
import functools

import jax
import jax.numpy as jnp
from jax import lax
from jax.experimental import pallas as pl
from jax.experimental.pallas import tpu as pltpu


def _bert_emb_kernel(tok_ids_ref, seg_ids_ref,                 # scalar prefetch (SMEM), (B, T)
                     tok_tab_ref, pos_ref, seg_tab_ref,        # VMEM inputs
                     gamma_ref, beta_ref,
                     out_ref,                                  # VMEM output (TQ, D) (b, q squeezed)
                     rows_ref,                                 # VMEM scratch (TQ, D)
                     *, eps, vocab_size, n_segments):
    b = pl.program_id(0)
    q = pl.program_id(1)
    TQ, D = out_ref.shape
    base = q * TQ

    # ---- per-token gather of token-embedding and segment-embedding rows.
    # This is the only piece that genuinely needs dynamic slices.  Partial
    # unroll (8 rows = one f32 sublane group) keeps LLO scheduler visibility
    # without a full-unroll code/vreg blowup.
    def gather_row(t, carry):
        tid = jnp.clip(tok_ids_ref[b, base + t], 0, vocab_size - 1)   # avoid OOB VMEM reads
        sid = jnp.clip(seg_ids_ref[b, base + t], 0, n_segments - 1)
        rows_ref[pl.ds(t, 1), :] = (tok_tab_ref[pl.ds(tid, 1), :]
                                    + seg_tab_ref[pl.ds(sid, 1), :])
        return carry

    lax.fori_loop(0, TQ, gather_row, 0, unroll=min(8, TQ))

    # ---- vectorized tile math on the whole (TQ, D) tile.
    # Positional rows for this token block arrive pre-tiled via BlockSpec:
    # one VALU add, no dynamic slices.
    emb = rows_ref[...].astype(jnp.float32) + pos_ref[...].astype(jnp.float32)

    # LayerNorm over hidden dim (biased variance, eps inside rsqrt -> matches
    # torch.nn.LayerNorm), one cross-lane reduce pass per tile.
    mean = jnp.mean(emb, axis=-1, keepdims=True)
    cent = emb - mean
    var = jnp.mean(cent * cent, axis=-1, keepdims=True)
    norm = cent * lax.rsqrt(var + eps)

    out_ref[...] = (norm * gamma_ref[...] + beta_ref[...]).astype(out_ref.dtype)

    # TODO(synk): dropout omitted (inference / eval mode -> identity).


def bert_embeddings(tok_ids, seg_ids, tok_tab, pos_tab, seg_tab, gamma, beta,
                    eps=1e-12, block_t=128):
    B, T = tok_ids.shape
    V, D = tok_tab.shape
    max_len = pos_tab.shape[0]
    n_seg = seg_tab.shape[0]
    assert T <= max_len, "sequence longer than positional table"

    TQ = min(block_t, T)
    assert T % TQ == 0, "T must be divisible by the token-block size"

    gamma2 = gamma.reshape(1, D)
    beta2 = beta.reshape(1, D)

    grid_spec = pltpu.PrefetchScalarGridSpec(
        num_scalar_prefetch=2,                      # tok_ids, seg_ids -> SMEM
        grid=(B, T // TQ),
        in_specs=[
            # TODO(synk): for real vocabularies (e.g. 30522x768) keep tok_tab
            # in HBM (memory_space=pl.ANY) and double-buffer DMA the rows of
            # block q+1 while normalizing block q; full-table VMEM residency
            # only works for small vocabs.
            pl.BlockSpec(tok_tab.shape, lambda b, q, *_: (0, 0)),
            pl.BlockSpec((TQ, D), lambda b, q, *_: (q, 0)),       # pos rows of block q
            pl.BlockSpec(seg_tab.shape, lambda b, q, *_: (0, 0)),
            pl.BlockSpec((1, D), lambda b, q, *_: (0, 0)),        # gamma
            pl.BlockSpec((1, D), lambda b, q, *_: (0, 0)),        # beta
        ],
        out_specs=pl.BlockSpec((None, TQ, D), lambda b, q, *_: (b, q, 0)),
        scratch_shapes=[pltpu.VMEM((TQ, D), jnp.float32)],
    )

    kernel = functools.partial(_bert_emb_kernel, eps=eps, vocab_size=V,
                               n_segments=n_seg)
    return pl.pallas_call(
        kernel,
        out_shape=jax.ShapeDtypeStruct((B, T, D), jnp.float32),
        grid_spec=grid_spec,
        compiler_params=pltpu.CompilerParams(
            # Both grid axes are independent -> shard across TensorCores where
            # available; harmless elsewhere.
            dimension_semantics=("parallel", "parallel"),
        ),
    )(tok_ids, seg_ids, tok_tab, pos_tab, seg_tab, gamma2, beta2)


def _reference(tok_ids, seg_ids, tok_tab, pos_tab, seg_tab, gamma, beta,
               eps=1e-12):
    B, T = tok_ids.shape
    emb = tok_tab[tok_ids] + pos_tab[jnp.arange(T)][None, :, :] + seg_tab[seg_ids]
    mean = emb.mean(-1, keepdims=True)
    var = ((emb - mean) ** 2).mean(-1, keepdims=True)
    return (emb - mean) / jnp.sqrt(var + eps) * gamma + beta


if __name__ == "__main__":
    # Small synthetic BertConfig: vocab=64, max_len=16, n_segments=2, n_embd=128.
    B, T, D = 2, 8, 128
    vocab_size, max_len, n_segments = 64, 16, 2

    key = jax.random.PRNGKey(0)
    k_tok, k_pos, k_seg, k_ids, k_segids = jax.random.split(key, 5)

    tok_tab = (0.02 * jax.random.normal(k_tok, (vocab_size, D))).astype(jnp.float32)
    pos_tab = (0.02 * jax.random.normal(k_pos, (max_len, D))).astype(jnp.float32)
    seg_tab = (0.02 * jax.random.normal(k_seg, (n_segments, D))).astype(jnp.float32)
    gamma = jnp.ones((D,), jnp.float32)   # nn.LayerNorm default weight
    beta = jnp.zeros((D,), jnp.float32)   # nn.LayerNorm default bias

    tok_ids = jax.random.randint(k_ids, (B, T), 0, vocab_size, dtype=jnp.int32)
    seg_ids = jax.random.randint(k_segids, (B, T), 0, n_segments, dtype=jnp.int32)

    out = bert_embeddings(tok_ids, seg_ids, tok_tab, pos_tab, seg_tab, gamma, beta)
    out = jax.block_until_ready(out)

    ref = _reference(tok_ids, seg_ids, tok_tab, pos_tab, seg_tab, gamma, beta)
    assert out.shape == (B, T, D)
    assert jnp.allclose(out, ref, rtol=1e-5, atol=1e-5), "mismatch vs reference"
    print("KERNEL_OK")
</pallas_src>

<mosaic_0001>
module attributes {stable_mosaic.version = 11 : i64} {
  func.func @_bert_emb_kernel(%arg0: i32, %arg1: i32, %arg2: memref<2x8xi32, #tpu.memory_space<smem>>, %arg3: memref<2x8xi32, #tpu.memory_space<smem>>, %arg4: memref<64x128xf32, #tpu.memory_space<vmem>>, %arg5: memref<8x128xf32, #tpu.memory_space<vmem>>, %arg6: memref<2x128xf32, #tpu.memory_space<vmem>>, %arg7: memref<1x128xf32, #tpu.memory_space<vmem>>, %arg8: memref<1x128xf32, #tpu.memory_space<vmem>>, %arg9: memref<1x8x128xf32, #tpu.memory_space<vmem>>, %arg10: memref<8x128xf32, #tpu.memory_space<vmem>>) attributes {dimension_semantics = [#tpu.dimension_semantics<parallel>, #tpu.dimension_semantics<parallel>], iteration_bounds = array<i64: 2, 1>, scalar_prefetch = 2 : i64, scratch_operands = 1 : i64, tpu.core_type = #tpu.core_type<tc>, window_params = [{pipeline_mode = #tpu.pipeline_mode<synchronous>, transform_indices = @transform_0, window_bounds = array<i64: 64, 128>}, {transform_indices = @transform_1, window_bounds = array<i64: 8, 128>}, {pipeline_mode = #tpu.pipeline_mode<synchronous>, transform_indices = @transform_2, window_bounds = array<i64: 2, 128>}, {pipeline_mode = #tpu.pipeline_mode<synchronous>, transform_indices = @transform_3, window_bounds = array<i64: 1, 128>}, {pipeline_mode = #tpu.pipeline_mode<synchronous>, transform_indices = @transform_4, window_bounds = array<i64: 1, 128>}, {transform_indices = @transform_5, window_bounds = array<i64: 1, 8, 128>}]} {
    %c8_i32 = arith.constant 8 : i32
    %0 = arith.muli %arg1, %c8_i32 : i32
    %c0_i32 = arith.constant 0 : i32
    %1 = arith.addi %0, %c0_i32 : i32
    %2 = arith.index_cast %arg0 : i32 to index
    %3 = arith.index_cast %1 : i32 to index
    %4 = memref.load %arg2[%2, %3] : memref<2x8xi32, #tpu.memory_space<smem>>
    %c0_i32_0 = arith.constant 0 : i32
    %c63_i32 = arith.constant 63 : i32
    %5 = arith.maxsi %c0_i32_0, %4 : i32
    %6 = arith.minsi %c63_i32, %5 : i32
    %7 = arith.addi %0, %c0_i32 : i32
    %8 = arith.index_cast %arg0 : i32 to index
    %9 = arith.index_cast %7 : i32 to index
    %10 = memref.load %arg3[%8, %9] : memref<2x8xi32, #tpu.memory_space<smem>>
    %c0_i32_1 = arith.constant 0 : i32
    %c1_i32 = arith.constant 1 : i32
    %11 = arith.maxsi %c0_i32_1, %10 : i32
    %12 = arith.minsi %c1_i32, %11 : i32
    %13 = arith.index_cast %6 : i32 to index
    %c0 = arith.constant 0 : index
    %14 = vector.load %arg4[%13, %c0] : memref<64x128xf32, #tpu.memory_space<vmem>>, vector<1x128xf32>
    %15 = arith.index_cast %12 : i32 to index
    %c0_2 = arith.constant 0 : index
    %16 = vector.load %arg6[%15, %c0_2] : memref<2x128xf32, #tpu.memory_space<vmem>>, vector<1x128xf32>
    %17 = arith.addf %14, %16 : vector<1x128xf32>
    %18 = arith.index_cast %c0_i32 : i32 to index
    %c0_3 = arith.constant 0 : index
    %19 = vector.load %arg10[%18, %c0_3] : memref<8x128xf32, #tpu.memory_space<vmem>>, vector<1x128xf32>
    tpu.vector_store %arg10[%18, %c0_3], %17 {strides = array<i32>} : memref<8x128xf32, #tpu.memory_space<vmem>>, vector<1x128xf32>,
    %c1_i32_4 = arith.constant 1 : i32
    %20 = arith.addi %0, %c1_i32_4 : i32
    %21 = arith.index_cast %arg0 : i32 to index
    %22 = arith.index_cast %20 : i32 to index
    %23 = memref.load %arg2[%21, %22] : memref<2x8xi32, #tpu.memory_space<smem>>
    %c0_i32_5 = arith.constant 0 : i32
    %c63_i32_6 = arith.constant 63 : i32
    %24 = arith.maxsi %c0_i32_5, %23 : i32
    %25 = arith.minsi %c63_i32_6, %24 : i32
    %26 = arith.addi %0, %c1_i32_4 : i32
    %27 = arith.index_cast %arg0 : i32 to index
    %28 = arith.index_cast %26 : i32 to index
    %29 = memref.load %arg3[%27, %28] : memref<2x8xi32, #tpu.memory_space<smem>>
    %c0_i32_7 = arith.constant 0 : i32
    %c1_i32_8 = arith.constant 1 : i32
    %30 = arith.maxsi %c0_i32_7, %29 : i32
    %31 = arith.minsi %c1_i32_8, %30 : i32
    %32 = arith.index_cast %25 : i32 to index
    %c0_9 = arith.constant 0 : index
    %33 = vector.load %arg4[%32, %c0_9] : memref<64x128xf32, #tpu.memory_space<vmem>>, vector<1x128xf32>
    %34 = arith.index_cast %31 : i32 to index
    %c0_10 = arith.constant 0 : index
    %35 = vector.load %arg6[%34, %c0_10] : memref<2x128xf32, #tpu.memory_space<vmem>>, vector<1x128xf32>
    %36 = arith.addf %33, %35 : vector<1x128xf32>
    %37 = arith.index_cast %c1_i32_4 : i32 to index
    %c0_11 = arith.constant 0 : index
    %38 = vector.load %arg10[%37, %c0_11] : memref<8x128xf32, #tpu.memory_space<vmem>>, vector<1x128xf32>
    tpu.vector_store %arg10[%37, %c0_11], %36 {strides = array<i32>} : memref<8x128xf32, #tpu.memory_space<vmem>>, vector<1x128xf32>,
    %c2_i32 = arith.constant 2 : i32
    %39 = arith.addi %0, %c2_i32 : i32
    %40 = arith.index_cast %arg0 : i32 to index
    %41 = arith.index_cast %39 : i32 to index
    %42 = memref.load %arg2[%40, %41] : memref<2x8xi32, #tpu.memory_space<smem>>
    %c0_i32_12 = arith.constant 0 : i32
    %c63_i32_13 = arith.constant 63 : i32
    %43 = arith.maxsi %c0_i32_12, %42 : i32
    %44 = arith.minsi %c63_i32_13, %43 : i32
    %45 = arith.addi %0, %c2_i32 : i32
    %46 = arith.index_cast %arg0 : i32 to index
    %47 = arith.index_cast %45 : i32 to index
    %48 = memref.load %arg3[%46, %47] : memref<2x8xi32, #tpu.memory_space<smem>>
    %c0_i32_14 = arith.constant 0 : i32
    %c1_i32_15 = arith.constant 1 : i32
    %49 = arith.maxsi %c0_i32_14, %48 : i32
    %50 = arith.minsi %c1_i32_15, %49 : i32
    %51 = arith.index_cast %44 : i32 to index
    %c0_16 = arith.constant 0 : index
    %52 = vector.load %arg4[%51, %c0_16] : memref<64x128xf32, #tpu.memory_space<vmem>>, vector<1x128xf32>
    %53 = arith.index_cast %50 : i32 to index
    %c0_17 = arith.constant 0 : index
    %54 = vector.load %arg6[%53, %c0_17] : memref<2x128xf32, #tpu.memory_space<vmem>>, vector<1x128xf32>
    %55 = arith.addf %52, %54 : vector<1x128xf32>
    %56 = arith.index_cast %c2_i32 : i32 to index
    %c0_18 = arith.constant 0 : index
    %57 = vector.load %arg10[%56, %c0_18] : memref<8x128xf32, #tpu.memory_space<vmem>>, vector<1x128xf32>
    tpu.vector_store %arg10[%56, %c0_18], %55 {strides = array<i32>} : memref<8x128xf32, #tpu.memory_space<vmem>>, vector<1x128xf32>,
    %c3_i32 = arith.constant 3 : i32
    %58 = arith.addi %0, %c3_i32 : i32
    %59 = arith.index_cast %arg0 : i32 to index
    %60 = arith.index_cast %58 : i32 to index
    %61 = memref.load %arg2[%59, %60] : memref<2x8xi32, #tpu.memory_space<smem>>
    %c0_i32_19 = arith.constant 0 : i32
    %c63_i32_20 = arith.constant 63 : i32
    %62 = arith.maxsi %c0_i32_19, %61 : i32
    %63 = arith.minsi %c63_i32_20, %62 : i32
    %64 = arith.addi %0, %c3_i32 : i32
    %65 = arith.index_cast %arg0 : i32 to index
    %66 = arith.index_cast %64 : i32 to index
    %67 = memref.load %arg3[%65, %66] : memref<2x8xi32, #tpu.memory_space<smem>>
    %c0_i32_21 = arith.constant 0 : i32
    %c1_i32_22 = arith.constant 1 : i32
    %68 = arith.maxsi %c0_i32_21, %67 : i32
    %69 = arith.minsi %c1_i32_22, %68 : i32
    %70 = arith.index_cast %63 : i32 to index
    %c0_23 = arith.constant 0 : index
    %71 = vector.load %arg4[%70, %c0_23] : memref<64x128xf32, #tpu.memory_space<vmem>>, vector<1x128xf32>
    %72 = arith.index_cast %69 : i32 to index
    %c0_24 = arith.constant 0 : index
    %73 = vector.load %arg6[%72, %c0_24] : memref<2x128xf32, #tpu.memory_space<vmem>>, vector<1x128xf32>
    %74 = arith.addf %71, %73 : vector<1x128xf32>
    %75 = arith.index_cast %c3_i32 : i32 to index
    %c0_25 = arith.constant 0 : index
    %76 = vector.load %arg10[%75, %c0_25] : memref<8x128xf32, #tpu.memory_space<vmem>>, vector<1x128xf32>
    tpu.vector_store %arg10[%75, %c0_25], %74 {strides = array<i32>} : memref<8x128xf32, #tpu.memory_space<vmem>>, vector<1x128xf32>,
    %c4_i32 = arith.constant 4 : i32
    %77 = arith.addi %0, %c4_i32 : i32
    %78 = arith.index_cast %arg0 : i32 to index
    %79 = arith.index_cast %77 : i32 to index
    %80 = memref.load %arg2[%78, %79] : memref<2x8xi32, #tpu.memory_space<smem>>
    %c0_i32_26 = arith.constant 0 : i32
    %c63_i32_27 = arith.constant 63 : i32
    %81 = arith.maxsi %c0_i32_26, %80 : i32
    %82 = arith.minsi %c63_i32_27, %81 : i32
    %83 = arith.addi %0, %c4_i32 : i32
    %84 = arith.index_cast %arg0 : i32 to index
    %85 = arith.index_cast %83 : i32 to index
    %86 = memref.load %arg3[%84, %85] : memref<2x8xi32, #tpu.memory_space<smem>>
    %c0_i32_28 = arith.constant 0 : i32
    %c1_i32_29 = arith.constant 1 : i32
    %87 = arith.maxsi %c0_i32_28, %86 : i32
    %88 = arith.minsi %c1_i32_29, %87 : i32
    %89 = arith.index_cast %82 : i32 to index
    %c0_30 = arith.constant 0 : index
    %90 = vector.load %arg4[%89, %c0_30] : memref<64x128xf32, #tpu.memory_space<vmem>>, vector<1x128xf32>
    %91 = arith.index_cast %88 : i32 to index
    %c0_31 = arith.constant 0 : index
    %92 = vector.load %arg6[%91, %c0_31] : memref<2x128xf32, #tpu.memory_space<vmem>>, vector<1x128xf32>
    %93 = arith.addf %90, %92 : vector<1x128xf32>
    %94 = arith.index_cast %c4_i32 : i32 to index
    %c0_32 = arith.constant 0 : index
    %95 = vector.load %arg10[%94, %c0_32] : memref<8x128xf32, #tpu.memory_space<vmem>>, vector<1x128xf32>
    tpu.vector_store %arg10[%94, %c0_32], %93 {strides = array<i32>} : memref<8x128xf32, #tpu.memory_space<vmem>>, vector<1x128xf32>,
    %c5_i32 = arith.constant 5 : i32
    %96 = arith.addi %0, %c5_i32 : i32
    %97 = arith.index_cast %arg0 : i32 to index
    %98 = arith.index_cast %96 : i32 to index
    %99 = memref.load %arg2[%97, %98] : memref<2x8xi32, #tpu.memory_space<smem>>
    %c0_i32_33 = arith.constant 0 : i32
    %c63_i32_34 = arith.constant 63 : i32
    %100 = arith.maxsi %c0_i32_33, %99 : i32
    %101 = arith.minsi %c63_i32_34, %100 : i32
    %102 = arith.addi %0, %c5_i32 : i32
    %103 = arith.index_cast %arg0 : i32 to index
    %104 = arith.index_cast %102 : i32 to index
    %105 = memref.load %arg3[%103, %104] : memref<2x8xi32, #tpu.memory_space<smem>>
    %c0_i32_35 = arith.constant 0 : i32
    %c1_i32_36 = arith.constant 1 : i32
    %106 = arith.maxsi %c0_i32_35, %105 : i32
    %107 = arith.minsi %c1_i32_36, %106 : i32
    %108 = arith.index_cast %101 : i32 to index
    %c0_37 = arith.constant 0 : index
    %109 = vector.load %arg4[%108, %c0_37] : memref<64x128xf32, #tpu.memory_space<vmem>>, vector<1x128xf32>
    %110 = arith.index_cast %107 : i32 to index
    %c0_38 = arith.constant 0 : index
    %111 = vector.load %arg6[%110, %c0_38] : memref<2x128xf32, #tpu.memory_space<vmem>>, vector<1x128xf32>
    %112 = arith.addf %109, %111 : vector<1x128xf32>
    %113 = arith.index_cast %c5_i32 : i32 to index
    %c0_39 = arith.constant 0 : index
    %114 = vector.load %arg10[%113, %c0_39] : memref<8x128xf32, #tpu.memory_space<vmem>>, vector<1x128xf32>
    tpu.vector_store %arg10[%113, %c0_39], %112 {strides = array<i32>} : memref<8x128xf32, #tpu.memory_space<vmem>>, vector<1x128xf32>,
    %c6_i32 = arith.constant 6 : i32
    %115 = arith.addi %0, %c6_i32 : i32
    %116 = arith.index_cast %arg0 : i32 to index
    %117 = arith.index_cast %115 : i32 to index
    %118 = memref.load %arg2[%116, %117] : memref<2x8xi32, #tpu.memory_space<smem>>
    %c0_i32_40 = arith.constant 0 : i32
    %c63_i32_41 = arith.constant 63 : i32
    %119 = arith.maxsi %c0_i32_40, %118 : i32
    %120 = arith.minsi %c63_i32_41, %119 : i32
    %121 = arith.addi %0, %c6_i32 : i32
    %122 = arith.index_cast %arg0 : i32 to index
    %123 = arith.index_cast %121 : i32 to index
    %124 = memref.load %arg3[%122, %123] : memref<2x8xi32, #tpu.memory_space<smem>>
    %c0_i32_42 = arith.constant 0 : i32
    %c1_i32_43 = arith.constant 1 : i32
    %125 = arith.maxsi %c0_i32_42, %124 : i32
    %126 = arith.minsi %c1_i32_43, %125 : i32
    %127 = arith.index_cast %120 : i32 to index
    %c0_44 = arith.constant 0 : index
    %128 = vector.load %arg4[%127, %c0_44] : memref<64x128xf32, #tpu.memory_space<vmem>>, vector<1x128xf32>
    %129 = arith.index_cast %126 : i32 to index
    %c0_45 = arith.constant 0 : index
    %130 = vector.load %arg6[%129, %c0_45] : memref<2x128xf32, #tpu.memory_space<vmem>>, vector<1x128xf32>
    %131 = arith.addf %128, %130 : vector<1x128xf32>
    %132 = arith.index_cast %c6_i32 : i32 to index
    %c0_46 = arith.constant 0 : index
    %133 = vector.load %arg10[%132, %c0_46] : memref<8x128xf32, #tpu.memory_space<vmem>>, vector<1x128xf32>
    tpu.vector_store %arg10[%132, %c0_46], %131 {strides = array<i32>} : memref<8x128xf32, #tpu.memory_space<vmem>>, vector<1x128xf32>,
    %c7_i32 = arith.constant 7 : i32
    %134 = arith.addi %0, %c7_i32 : i32
    %135 = arith.index_cast %arg0 : i32 to index
    %136 = arith.index_cast %134 : i32 to index
    %137 = memref.load %arg2[%135, %136] : memref<2x8xi32, #tpu.memory_space<smem>>
    %c0_i32_47 = arith.constant 0 : i32
    %c63_i32_48 = arith.constant 63 : i32
    %138 = arith.maxsi %c0_i32_47, %137 : i32
    %139 = arith.minsi %c63_i32_48, %138 : i32
    %140 = arith.addi %0, %c7_i32 : i32
    %141 = arith.index_cast %arg0 : i32 to index
    %142 = arith.index_cast %140 : i32 to index
    %143 = memref.load %arg3[%141, %142] : memref<2x8xi32, #tpu.memory_space<smem>>
    %c0_i32_49 = arith.constant 0 : i32
    %c1_i32_50 = arith.constant 1 : i32
    %144 = arith.maxsi %c0_i32_49, %143 : i32
    %145 = arith.minsi %c1_i32_50, %144 : i32
    %146 = arith.index_cast %139 : i32 to index
    %c0_51 = arith.constant 0 : index
    %147 = vector.load %arg4[%146, %c0_51] : memref<64x128xf32, #tpu.memory_space<vmem>>, vector<1x128xf32>
    %148 = arith.index_cast %145 : i32 to index
    %c0_52 = arith.constant 0 : index
    %149 = vector.load %arg6[%148, %c0_52] : memref<2x128xf32, #tpu.memory_space<vmem>>, vector<1x128xf32>
    %150 = arith.addf %147, %149 : vector<1x128xf32>
    %151 = arith.index_cast %c7_i32 : i32 to index
    %c0_53 = arith.constant 0 : index
    %152 = vector.load %arg10[%151, %c0_53] : memref<8x128xf32, #tpu.memory_space<vmem>>, vector<1x128xf32>
    tpu.vector_store %arg10[%151, %c0_53], %150 {strides = array<i32>} : memref<8x128xf32, #tpu.memory_space<vmem>>, vector<1x128xf32>,
    %c8_i32_54 = arith.constant 8 : i32
    %c0_55 = arith.constant 0 : index
    %c0_56 = arith.constant 0 : index
    %153 = vector.load %arg10[%c0_55, %c0_56] : memref<8x128xf32, #tpu.memory_space<vmem>>, vector<8x128xf32>
    %c0_57 = arith.constant 0 : index
    %c0_58 = arith.constant 0 : index
    %154 = vector.load %arg5[%c0_57, %c0_58] : memref<8x128xf32, #tpu.memory_space<vmem>>, vector<8x128xf32>
    %155 = arith.addf %153, %154 : vector<8x128xf32>
    %cst = arith.constant dense<0.000000e+00> : vector<8xf32>
    %156 = vector.multi_reduction <add>, %155, %cst [1] : vector<8x128xf32> to vector<8xf32>
    %157 = vector.shape_cast %156 : vector<8xf32> to vector<8x1xf32>
    %cst_59 = arith.constant 1.280000e+02 : f32
    %158 = vector.broadcast %cst_59 : f32 to vector<8x1xf32>
    %159 = arith.divf %157, %158 : vector<8x1xf32>
    %160 = vector.broadcast %159 : vector<8x1xf32> to vector<8x128xf32>
    %161 = arith.subf %155, %160 : vector<8x128xf32>
    %162 = arith.mulf %161, %161 : vector<8x128xf32>
    %cst_60 = arith.constant dense<0.000000e+00> : vector<8xf32>
    %163 = vector.multi_reduction <add>, %162, %cst_60 [1] : vector<8x128xf32> to vector<8xf32>
    %164 = vector.shape_cast %163 : vector<8xf32> to vector<8x1xf32>
    %cst_61 = arith.constant 1.280000e+02 : f32
    %165 = vector.broadcast %cst_61 : f32 to vector<8x1xf32>
    %166 = arith.divf %164, %165 : vector<8x1xf32>
    %cst_62 = arith.constant 9.99999996E-13 : f32
    %167 = vector.broadcast %cst_62 : f32 to vector<8x1xf32>
    %168 = arith.addf %166, %167 : vector<8x1xf32>
    %169 = math.rsqrt %168 : vector<8x1xf32>
    %170 = vector.broadcast %169 : vector<8x1xf32> to vector<8x128xf32>
    %171 = arith.mulf %161, %170 : vector<8x128xf32>
    %c0_63 = arith.constant 0 : index
    %c0_64 = arith.constant 0 : index
    %172 = vector.load %arg7[%c0_63, %c0_64] : memref<1x128xf32, #tpu.memory_space<vmem>>, vector<1x128xf32>
    %173 = vector.broadcast %172 : vector<1x128xf32> to vector<8x128xf32>
    %174 = arith.mulf %171, %173 : vector<8x128xf32>
    %c0_65 = arith.constant 0 : index
    %c0_66 = arith.constant 0 : index
    %175 = vector.load %arg8[%c0_65, %c0_66] : memref<1x128xf32, #tpu.memory_space<vmem>>, vector<1x128xf32>
    %176 = vector.broadcast %175 : vector<1x128xf32> to vector<8x128xf32>
    %177 = arith.addf %174, %176 : vector<8x128xf32>
    %c0_67 = arith.constant 0 : index
    %c0_68 = arith.constant 0 : index
    %c0_69 = arith.constant 0 : index
    %178 = vector.load %arg9[%c0_67, %c0_68, %c0_69] : memref<1x8x128xf32, #tpu.memory_space<vmem>>, vector<1x8x128xf32>
    %179 = vector.shape_cast %178 : vector<1x8x128xf32> to vector<8x128xf32>
    %180 = vector.shape_cast %177 : vector<8x128xf32> to vector<1x8x128xf32>
    tpu.vector_store %arg9[%c0_67, %c0_68, %c0_69], %180 {strides = array<i32>} : memref<1x8x128xf32, #tpu.memory_space<vmem>>, vector<1x8x128xf32>,
    return
  }
  func.func @transform_0(%arg0: i32, %arg1: i32, %arg2: memref<2x8xi32, #tpu.memory_space<smem>>, %arg3: memref<2x8xi32, #tpu.memory_space<smem>>) -> (i32, i32) {
    %c0_i32 = arith.constant 0 : i32
    %c0_i32_0 = arith.constant 0 : i32
    %c0_i32_1 = arith.constant 0 : i32
    return %c0_i32, %c0_i32_0 : i32, i32
  }
  func.func @transform_1(%arg0: i32, %arg1: i32, %arg2: memref<2x8xi32, #tpu.memory_space<smem>>, %arg3: memref<2x8xi32, #tpu.memory_space<smem>>) -> (i32, i32) {
    %c0_i32 = arith.constant 0 : i32
    %c0_i32_0 = arith.constant 0 : i32
    return %arg1, %c0_i32 : i32, i32
  }
  func.func @transform_2(%arg0: i32, %arg1: i32, %arg2: memref<2x8xi32, #tpu.memory_space<smem>>, %arg3: memref<2x8xi32, #tpu.memory_space<smem>>) -> (i32, i32) {
    %c0_i32 = arith.constant 0 : i32
    %c0_i32_0 = arith.constant 0 : i32
    %c0_i32_1 = arith.constant 0 : i32
    return %c0_i32, %c0_i32_0 : i32, i32
  }
  func.func @transform_3(%arg0: i32, %arg1: i32, %arg2: memref<2x8xi32, #tpu.memory_space<smem>>, %arg3: memref<2x8xi32, #tpu.memory_space<smem>>) -> (i32, i32) {
    %c0_i32 = arith.constant 0 : i32
    %c0_i32_0 = arith.constant 0 : i32
    %c0_i32_1 = arith.constant 0 : i32
    return %c0_i32, %c0_i32_0 : i32, i32
  }
  func.func @transform_4(%arg0: i32, %arg1: i32, %arg2: memref<2x8xi32, #tpu.memory_space<smem>>, %arg3: memref<2x8xi32, #tpu.memory_space<smem>>) -> (i32, i32) {
    %c0_i32 = arith.constant 0 : i32
    %c0_i32_0 = arith.constant 0 : i32
    %c0_i32_1 = arith.constant 0 : i32
    return %c0_i32, %c0_i32_0 : i32, i32
  }
  func.func @transform_5(%arg0: i32, %arg1: i32, %arg2: memref<2x8xi32, #tpu.memory_space<smem>>, %arg3: memref<2x8xi32, #tpu.memory_space<smem>>) -> (i32, i32, i32) {
    %c0_i32 = arith.constant 0 : i32
    %c0_i32_0 = arith.constant 0 : i32
    return %arg0, %arg1, %c0_i32 : i32, i32, i32
  }
}

</mosaic_0001>

<llo_original>
// kernel: tpu_custom_call.1
$region0: #{tpu_custom_call.1}
  #allocation0 [shape = 'u32[]', space=smem, size = 0x4, offset = 0x4, fixed_abs, tag = 'smem constant byte address 0x4 - core index']
  #allocation1 [shape = 'u32[144,128]{1,0:T(1,128)}', space=vmem, size = 0x12000, scoped, tag = 'internal scratch']
  #allocation2 [shape = 'f32[8,128]{1,0:T(8,128)}', space=vmem, size = 0x1000, scoped, tag = 'scratch operand']
  #allocation3 [shape = 's32[1]{0}', space=sflag, size = 0x4, scoped, tag = 'scoped memory for tpu_custom_call.1']
  #allocation4 [shape = 'u8[1024]{0}', space=smem, size = 0x400, scoped, tag = 'prefetched SMEM operand 0']
  #allocation5 [shape = 'u8[1024]{0}', space=smem, size = 0x400, scoped, tag = 'prefetched SMEM operand 1']
  %s0 = inlined_call_operand.hbm [shape: s32[2,8], index: 0, kind: input, shape index: {}]
  %s1 = inlined_call_operand.vmem [shape: s32[2,8], index: 1, kind: input, shape index: {}]
  %s2 = inlined_call_operand.hbm [shape: f32[64,128], index: 2, kind: input, shape index: {}]
  %s3 = inlined_call_operand.hbm [shape: f32[16,128], index: 3, kind: input, shape index: {}]
  %s4 = inlined_call_operand.vmem [shape: f32[2,128], index: 4, kind: input, shape index: {}]
  %s5 = inlined_call_operand.vmem [shape: f32[1,128], index: 5, kind: input, shape index: {}]
  %s6 = inlined_call_operand.vmem [shape: f32[1,128], index: 6, kind: input, shape index: {}]
  %s7 = inlined_call_operand.hbm [shape: f32[2,8,128], index: 7, kind: output, shape index: {}]
  %s8 = sld [smem:[#allocation0]]
  $region61: #{tpu_custom_call.1} parent=0
    _
  %s10 = ssub.s32 1, %s8
  %s11 = scalar_select 0, %s10, %s8
  %13 = dma.hbm_to_smem %s0, 32, [#allocation4], [#allocation3]
  %s14 = sshll.u32 %s1, 4
  %s15 = int_to_ptr.vmem [resolvable:$true] %s14
  %17 = dma.vmem_to_smem %s15, 32, [#allocation5], [#allocation3]
  %18 = dma.done [#allocation3], 64
  %19 = sfence
  $region1: #{tpu_custom_call.1} parent=0
    #allocation6 [shape = 'u8[32768]{0}', space=vmem, size = 0x8000, scoped, tag = 'input window, operand 2, single buffered']
    #allocation7 [shape = 's32[2]{0}', space=sflag, size = 0x8, scoped, tag = 'scoped memory for tpu_custom_call.1']
    #allocation8 [shape = 's32[2]{0}', space=sflag, size = 0x8, scoped, tag = 'scoped memory for tpu_custom_call.1']
    #allocation9 [shape = 'u8[4096]{0}', space=vmem, size = 0x1000, scoped, tag = 'input window, operand 3, single buffered']
    #allocation10 [shape = 's32[1]{0}', space=sflag, size = 0x4, scoped, tag = 'scoped memory for tpu_custom_call.1']
    #allocation11 [shape = 'u8[8192]{0}', space=vmem, size = 0x2000, scoped, tag = 'output window, operand 0']
    %20 = vsyncpa [#allocation7], 0
    %21 = vsyncpa [#allocation10], 0
    %22 = vsyncpa [#allocation8], 0
    %s23 = scalar_lea.sflag [#allocation8], 1
    %24 = vsyncpa %s23, 0
    loop: start=0, step=1, limit=4
    $region2: #{tpu_custom_call.1} parent=1 // loop_pre_header
      _
    $region3: #{tpu_custom_call.1} parent=1 // loop_header
      %s26 = sphi 0, %s30
      %p27 = scmp.ge.s32.totalorder %s26, 4
      %s33 = sphi 0, %s45
      %s34 = sphi 0, %s41
      %s35 = sphi 0, %s33
      %s36 = sphi 0, %s34
      %s37 = sphi 0, %s35
      %s38 = sphi 0, %s36
      %s46 = sphi 0, %s46
      %s48 = sphi 0, %s46
      %s49 = sphi 0, %s48
      %s63 = sphi 0, %s49
      %s69 = sphi 0, %s71
      %s72 = sphi 0, %s69
      %s73 = sphi 0, %s72
      %s89 = sphi 0, %s73
      %s93 = sphi 0, %s93
      %s95 = sphi 0, %s93
      %s96 = sphi 0, %s95
      %s110 = sphi 0, %s96
      %s114 = sphi 0, %s114
      %s116 = sphi 0, %s114
      %s117 = sphi 0, %s116
      %s131 = sphi 0, %s117
      %s135 = sphi 0, %s135
      %s137 = sphi 0, %s135
      %s138 = sphi 0, %s137
      %s152 = sphi 0, %s138
      %s160 = sphi 0, %s162
      %s163 = sphi 0, %s160
      %s164 = sphi 0, %s163
      %s180 = sphi 0, %s164
    $region4: #{tpu_custom_call.1} parent=1 // loop_header_branch
      %29 = sbr.rel (%p27) target = $region8
    $region5: #{tpu_custom_call.1} parent=1 // loop_body
      %s31 = ssub.s32 %s26, 1
      %s32 = ssub.s32 %s26, 2
      %s39 = sadd.s32 1, %s34
      %p40 = scmp.ge.s32.totalorder %s39, 1
      %s41 = scalar_select %p40, 0, %s39
      %s42 = sadd.s32 1, %s33
      %s43 = scalar_select %p40, %s42, %s33
      %p44 = scmp.ge.s32.totalorder %s43, 2
      %s45 = scalar_select %p44, 0, %s43
      %s47 = sadd.s32 %s46, 1
      %p50 = scmp.eq.s32.totalorder %s26, 1
      %p51 = scmp.ne.s32.totalorder %s46, %s48
      %p52 = scmp.eq.s32.totalorder %s26, 0
      %p53 = por %p51, %p52
      %p54 = scmp.ne.s32.totalorder %s46, %s48
      %p55 = scmp.eq.s32.totalorder %s31, 1
      %p56 = por %p54, %p55
      %p57 = scmp.ne.s32.totalorder %s48, %s49
      %p58 = scmp.eq.s32.totalorder %s31, 0
      %p59 = por %p57, %p58
      %p60 = scmp.ne.s32.totalorder %s48, %s49
      %p61 = scmp.eq.s32.totalorder %s32, 1
      %p62 = por %p60, %p61
      %p64 = scmp.ne.s32.totalorder %s49, %s63
      %p65 = scmp.eq.s32.totalorder %s32, 0
      %p66 = por %p64, %p65
      %s67 = ssub.s32 %s34, %s41
      %p68 = scmp.eq.s32.totalorder %s67, 0
      %s70 = sadd.s32 %s69, 1
      %s71 = scalar_select %p68, %s69, %s70
      %p74 = pneg %p68
      %p75 = scmp.eq.s32.totalorder %s26, 1
      %p76 = por %p74, %p75
      %p77 = scmp.ne.s32.totalorder %s69, %s72
      %p78 = scmp.eq.s32.totalorder %s26, 0
      %p79 = por %p77, %p78
      %p80 = scmp.ne.s32.totalorder %s69, %s72
      %p81 = scmp.eq.s32.totalorder %s31, 1
      %p82 = por %p80, %p81
      %p83 = scmp.ne.s32.totalorder %s72, %s73
      %p84 = scmp.eq.s32.totalorder %s31, 0
      %p85 = por %p83, %p84
      %p86 = scmp.ne.s32.totalorder %s72, %s73
      %p87 = scmp.eq.s32.totalorder %s32, 1
      %p88 = por %p86, %p87
      %p90 = scmp.ne.s32.totalorder %s73, %s89
      %p91 = scmp.eq.s32.totalorder %s32, 0
      %p92 = por %p90, %p91
      %s94 = sadd.s32 %s93, 1
      %p97 = scmp.eq.s32.totalorder %s26, 1
      %p98 = scmp.ne.s32.totalorder %s93, %s95
      %p99 = scmp.eq.s32.totalorder %s26, 0
      %p100 = por %p98, %p99
      %p101 = scmp.ne.s32.totalorder %s93, %s95
      %p102 = scmp.eq.s32.totalorder %s31, 1
      %p103 = por %p101, %p102
      %p104 = scmp.ne.s32.totalorder %s95, %s96
      %p105 = scmp.eq.s32.totalorder %s31, 0
      %p106 = por %p104, %p105
      %p107 = scmp.ne.s32.totalorder %s95, %s96
      %p108 = scmp.eq.s32.totalorder %s32, 1
      %p109 = por %p107, %p108
      %p111 = scmp.ne.s32.totalorder %s96, %s110
      %p112 = scmp.eq.s32.totalorder %s32, 0
      %p113 = por %p111, %p112
      %s115 = sadd.s32 %s114, 1
      %p118 = scmp.eq.s32.totalorder %s26, 1
      %p119 = scmp.ne.s32.totalorder %s114, %s116
      %p120 = scmp.eq.s32.totalorder %s26, 0
      %p121 = por %p119, %p120
      %p122 = scmp.ne.s32.totalorder %s114, %s116
      %p123 = scmp.eq.s32.totalorder %s31, 1
      %p124 = por %p122, %p123
      %p125 = scmp.ne.s32.totalorder %s116, %s117
      %p126 = scmp.eq.s32.totalorder %s31, 0
      %p127 = por %p125, %p126
      %p128 = scmp.ne.s32.totalorder %s116, %s117
      %p129 = scmp.eq.s32.totalorder %s32, 1
      %p130 = por %p128, %p129
      %p132 = scmp.ne.s32.totalorder %s117, %s131
      %p133 = scmp.eq.s32.totalorder %s32, 0
      %p134 = por %p132, %p133
      %s136 = sadd.s32 %s135, 1
      %p139 = scmp.eq.s32.totalorder %s26, 1
      %p140 = scmp.ne.s32.totalorder %s135, %s137
      %p141 = scmp.eq.s32.totalorder %s26, 0
      %p142 = por %p140, %p141
      %p143 = scmp.ne.s32.totalorder %s135, %s137
      %p144 = scmp.eq.s32.totalorder %s31, 1
      %p145 = por %p143, %p144
      %p146 = scmp.ne.s32.totalorder %s137, %s138
      %p147 = scmp.eq.s32.totalorder %s31, 0
      %p148 = por %p146, %p147
      %p149 = scmp.ne.s32.totalorder %s137, %s138
      %p150 = scmp.eq.s32.totalorder %s32, 1
      %p151 = por %p149, %p150
      %p153 = scmp.ne.s32.totalorder %s138, %s152
      %p154 = scmp.eq.s32.totalorder %s32, 0
      %p155 = por %p153, %p154
      %s156 = ssub.s32 %s33, %s45
      %s157 = ssub.s32 %s34, %s41
      %s158 = sor.u32 %s156, %s157
      %p159 = scmp.eq.s32.totalorder %s158, 0
      %s161 = sadd.s32 %s160, 1
      %s162 = scalar_select %p159, %s160, %s161
      %p165 = pneg %p159
      %p166 = scmp.eq.s32.totalorder %s26, 1
      %p167 = por %p165, %p166
      %p168 = scmp.ne.s32.totalorder %s160, %s163
      %p169 = scmp.eq.s32.totalorder %s26, 0
      %p170 = por %p168, %p169
      %p171 = scmp.ne.s32.totalorder %s160, %s163
      %p172 = scmp.eq.s32.totalorder %s31, 1
      %p173 = por %p171, %p172
      %p174 = scmp.ne.s32.totalorder %s163, %s164
      %p175 = scmp.eq.s32.totalorder %s31, 0
      %p176 = por %p174, %p175
      %p177 = scmp.ne.s32.totalorder %s163, %s164
      %p178 = scmp.eq.s32.totalorder %s32, 1
      %p179 = por %p177, %p178
      %p181 = scmp.ne.s32.totalorder %s164, %s180
      %p182 = scmp.eq.s32.totalorder %s32, 0
      %p183 = por %p181, %p182
      %p184 = scmp.le.s32.totalorder 1, %s26
      %p185 = scmp.lt.s32.totalorder %s26, 3
      %p186 = pnand %p184, %p185
      %p187 = pneg %p186
      // Predicated region
      $region9: #{tpu_custom_call.1} parent=5 // pred_check
        _
      $region10: #{tpu_custom_call.1} parent=5 // pred_check_branch
        %189 = sbr.rel (%p186) target = $region12
      $region11: #{tpu_custom_call.1} parent=5 // pred_region
        %s190 = ssub.s32 %s26, 1
        // Predicated region
        $region13: #{tpu_custom_call.1} parent=11 // pred_check
          %p191 = pneg %p59
        $region14: #{tpu_custom_call.1} parent=11 // pred_check_branch
          %193 = sbr.rel (%p191) target = $region16
        $region15: #{tpu_custom_call.1} parent=11 // pred_region
          %s195 = ssub.s32 1024, 1024
          %196 = vsyncadd [#allocation7], %s195
          %s197 = sshll.u32 [#allocation6], 4
          %s198 = int_to_ptr.vmem [resolvable:$true] %s197
          %203 = dma.hbm_to_vmem [thread:$0]  %s2, 1024, %s198, [#allocation7], 128, 128, 8
        $region16: #{tpu_custom_call.1} parent=11 // pred_fallthru
          _
        // Predicated region
        $region17: #{tpu_custom_call.1} parent=11 // pred_check
          %p204 = pneg %p85
        $region18: #{tpu_custom_call.1} parent=11 // pred_check_branch
          %206 = sbr.rel (%p204) target = $region20
        $region19: #{tpu_custom_call.1} parent=11 // pred_region
          %s208 = ssub.s32 128, 128
          %209 = vsyncadd [#allocation10], %s208
          %s210 = smul.addr %s36, 128
          %s211 = scalar_lea.hbm %s3, %s210
          %s213 = sshll.u32 [#allocation9], 4
          %s214 = int_to_ptr.vmem [resolvable:$true] %s213
          %216 = dma.hbm_to_vmem [thread:$0]  %s211, 128, %s214, [#allocation10]
        $region20: #{tpu_custom_call.1} parent=11 // pred_fallthru
          _
        // Predicated region
        $region21: #{tpu_custom_call.1} parent=11 // pred_check
          %p217 = pneg %p106
        $region22: #{tpu_custom_call.1} parent=11 // pred_check_branch
          %219 = sbr.rel (%p217) target = $region24
        $region23: #{tpu_custom_call.1} parent=11 // pred_region
          _
        $region24: #{tpu_custom_call.1} parent=11 // pred_fallthru
          _
        // Predicated region
        $region25: #{tpu_custom_call.1} parent=11 // pred_check
          %p220 = pneg %p127
        $region26: #{tpu_custom_call.1} parent=11 // pred_check_branch
          %222 = sbr.rel (%p220) target = $region28
        $region27: #{tpu_custom_call.1} parent=11 // pred_region
          _
        $region28: #{tpu_custom_call.1} parent=11 // pred_fallthru
          _
        // Predicated region
        $region29: #{tpu_custom_call.1} parent=11 // pred_check
          %p223 = pneg %p148
        $region30: #{tpu_custom_call.1} parent=11 // pred_check_branch
          %225 = sbr.rel (%p223) target = $region32
        $region31: #{tpu_custom_call.1} parent=11 // pred_region
          _
        $region32: #{tpu_custom_call.1} parent=11 // pred_fallthru
          _
      $region12: #{tpu_custom_call.1} parent=5 // pred_fallthru
        _
      %p226 = scmp.lt.s32.totalorder %s26, 2
      // Predicated region
      $region33: #{tpu_custom_call.1} parent=5 // pred_check
        %p227 = pneg %p226
      $region34: #{tpu_custom_call.1} parent=5 // pred_check_branch
        %229 = sbr.rel (%p227) target = $region36
      $region35: #{tpu_custom_call.1} parent=5 // pred_region
        _
      $region36: #{tpu_custom_call.1} parent=5 // pred_fallthru
        _
      %p230 = scmp.le.s32.totalorder 1, %s26
      %p231 = scmp.lt.s32.totalorder %s26, 3
      %p232 = pnand %p230, %p231
      %p233 = pneg %p232
      // Predicated region
      $region37: #{tpu_custom_call.1} parent=5 // pred_check
        _
      $region38: #{tpu_custom_call.1} parent=5 // pred_check_branch
        %235 = sbr.rel (%p232) target = $region40
      $region39: #{tpu_custom_call.1} parent=5 // pred_region
        %s236 = ssub.s32 %s26, 1
        // Predicated region
        $region41: #{tpu_custom_call.1} parent=39 // pred_check
          %p237 = pneg %p59
        $region42: #{tpu_custom_call.1} parent=39 // pred_check_branch
          %239 = sbr.rel (%p237) target = $region44
        $region43: #{tpu_custom_call.1} parent=39 // pred_region
          %240 = dma.done [#allocation7], 1024
        $region44: #{tpu_custom_call.1} parent=39 // pred_fallthru
          _
        // Predicated region
        $region45: #{tpu_custom_call.1} parent=39 // pred_check
          %p241 = pneg %p85
        $region46: #{tpu_custom_call.1} parent=39 // pred_check_branch
          %243 = sbr.rel (%p241) target = $region48
        $region47: #{tpu_custom_call.1} parent=39 // pred_region
          %244 = dma.done [#allocation10], 128
        $region48: #{tpu_custom_call.1} parent=39 // pred_fallthru
          _
        %p245 = pneg %p59
        %p246 = pneg %p56
        %p247 = pneg %p85
        %p248 = pneg %p82
        %p249 = pneg %p106
        %p250 = pneg %p103
        %p251 = pneg %p127
        %p252 = pneg %p124
        %p253 = pneg %p148
        %p254 = pneg %p145
        %p255 = pneg %p176
        %p256 = pneg %p173
        %s257 = sand.u32 %s163, 1
        %s258 = scalar_lea.sflag [#allocation8], %s257
        %s259 = sand.u32 %s163, 1
        %s260 = smul.addr %s259, 8
        %s261 = scalar_lea.vmem [#allocation11], %s260
        %s262 = smul.u32 %s36, 8
        %s263 = sshra.s32 %s262, 7
        %s264 = sand.u32 %s262, 127
        %s265 = sadd.s32 %s263, %s35
        %s266 = smul.u32 %s265, 128
        %s267 = sshra.s32 %s262, 7
        %s268 = sand.u32 %s262, 127
        %s269 = sadd.s32 %s266, %s268
        %s270 = sld [smem:[#allocation4 + %s269]]
        %p271 = scmp.gt.s32.totalorder %s270, 0
        %s272 = scalar_select %p271, %s270, 0
        %p273 = scmp.lt.s32.totalorder %s272, 63
        %s274 = scalar_select %p273, %s272, 63
        %s275 = sld [smem:[#allocation5 + %s269]]
        %p276 = scmp.gt.s32.totalorder %s275, 0
        %s277 = scalar_select %p276, %s275, 0
        %p278 = scmp.lt.s32.totalorder %s277, 1
        %s279 = scalar_select %p278, %s277, 1
        %s280 = scalar_lea.vmem [#allocation6], %s274
        %v281 = vld [vmem:[%s280] sm:$0x1]
        %s282 = scalar_lea.vmem %s4, %s279
        %v283 = vld [vmem:[%s282] sm:$0x1]
        %v284 = vadd.f32 %v281, %v283
        %285 = vst [vmem:[#allocation2] sm:$0x1] %v284
        %s286 = sadd.s32 %s262, 1
        %s287 = sshra.s32 %s286, 7
        %s288 = sand.u32 %s286, 127
        %s289 = sadd.s32 %s287, %s35
        %s290 = smul.u32 %s289, 128
        %s291 = sshra.s32 %s286, 7
        %s292 = sand.u32 %s286, 127
        %s293 = sadd.s32 %s290, %s292
        %s294 = sld [smem:[#allocation4 + %s293]]
        %p295 = scmp.gt.s32.totalorder %s294, 0
        %s296 = scalar_select %p295, %s294, 0
        %p297 = scmp.lt.s32.totalorder %s296, 63
        %s298 = scalar_select %p297, %s296, 63
        %s299 = sld [smem:[#allocation5 + %s293]]
        %p300 = scmp.gt.s32.totalorder %s299, 0
        %s301 = scalar_select %p300, %s299, 0
        %p302 = scmp.lt.s32.totalorder %s301, 1
        %s303 = scalar_select %p302, %s301, 1
        %s304 = scalar_lea.vmem [#allocation6], %s298
        %v305 = vld [vmem:[%s304] sm:$0x1]
        %s306 = scalar_lea.vmem %s4, %s303
        %v307 = vld [vmem:[%s306] sm:$0x1]
        %v308 = vadd.f32 %v305, %v307
        %309 = vst [vmem:[#allocation2 + $0x1] sm:$0x1] %v308
        %s310 = sadd.s32 %s262, 2
        %s311 = sshra.s32 %s310, 7
        %s312 = sand.u32 %s310, 127
        %s313 = sadd.s32 %s311, %s35
        %s314 = smul.u32 %s313, 128
        %s315 = sshra.s32 %s310, 7
        %s316 = sand.u32 %s310, 127
        %s317 = sadd.s32 %s314, %s316
        %s318 = sld [smem:[#allocation4 + %s317]]
        %p319 = scmp.gt.s32.totalorder %s318, 0
        %s320 = scalar_select %p319, %s318, 0
        %p321 = scmp.lt.s32.totalorder %s320, 63
        %s322 = scalar_select %p321, %s320, 63
        %s323 = sld [smem:[#allocation5 + %s317]]
        %p324 = scmp.gt.s32.totalorder %s323, 0
        %s325 = scalar_select %p324, %s323, 0
        %p326 = scmp.lt.s32.totalorder %s325, 1
        %s327 = scalar_select %p326, %s325, 1
        %s328 = scalar_lea.vmem [#allocation6], %s322
        %v329 = vld [vmem:[%s328] sm:$0x1]
        %s330 = scalar_lea.vmem %s4, %s327
        %v331 = vld [vmem:[%s330] sm:$0x1]
        %v332 = vadd.f32 %v329, %v331
        %333 = vst [vmem:[#allocation2 + $0x2] sm:$0x1] %v332
        %s334 = sadd.s32 %s262, 3
        %s335 = sshra.s32 %s334, 7
        %s336 = sand.u32 %s334, 127
        %s337 = sadd.s32 %s335, %s35
        %s338 = smul.u32 %s337, 128
        %s339 = sshra.s32 %s334, 7
        %s340 = sand.u32 %s334, 127
        %s341 = sadd.s32 %s338, %s340
        %s342 = sld [smem:[#allocation4 + %s341]]
        %p343 = scmp.gt.s32.totalorder %s342, 0
        %s344 = scalar_select %p343, %s342, 0
        %p345 = scmp.lt.s32.totalorder %s344, 63
        %s346 = scalar_select %p345, %s344, 63
        %s347 = sld [smem:[#allocation5 + %s341]]
        %p348 = scmp.gt.s32.totalorder %s347, 0
        %s349 = scalar_select %p348, %s347, 0
        %p350 = scmp.lt.s32.totalorder %s349, 1
        %s351 = scalar_select %p350, %s349, 1
        %s352 = scalar_lea.vmem [#allocation6], %s346
        %v353 = vld [vmem:[%s352] sm:$0x1]
        %s354 = scalar_lea.vmem %s4, %s351
        %v355 = vld [vmem:[%s354] sm:$0x1]
        %v356 = vadd.f32 %v353, %v355
        %357 = vst [vmem:[#allocation2 + $0x3] sm:$0x1] %v356
        %s358 = sadd.s32 %s262, 4
        %s359 = sshra.s32 %s358, 7
        %s360 = sand.u32 %s358, 127
        %s361 = sadd.s32 %s359, %s35
        %s362 = smul.u32 %s361, 128
        %s363 = sshra.s32 %s358, 7
        %s364 = sand.u32 %s358, 127
        %s365 = sadd.s32 %s362, %s364
        %s366 = sld [smem:[#allocation4 + %s365]]
        %p367 = scmp.gt.s32.totalorder %s366, 0
        %s368 = scalar_select %p367, %s366, 0
        %p369 = scmp.lt.s32.totalorder %s368, 63
        %s370 = scalar_select %p369, %s368, 63
        %s371 = sld [smem:[#allocation5 + %s365]]
        %p372 = scmp.gt.s32.totalorder %s371, 0
        %s373 = scalar_select %p372, %s371, 0
        %p374 = scmp.lt.s32.totalorder %s373, 1
        %s375 = scalar_select %p374, %s373, 1
        %s376 = scalar_lea.vmem [#allocation6], %s370
        %v377 = vld [vmem:[%s376] sm:$0x1]
        %s378 = scalar_lea.vmem %s4, %s375
        %v379 = vld [vmem:[%s378] sm:$0x1]
        %v380 = vadd.f32 %v377, %v379
        %381 = vst [vmem:[#allocation2 + $0x4] sm:$0x1] %v380
        %s382 = sadd.s32 %s262, 5
        %s383 = sshra.s32 %s382, 7
        %s384 = sand.u32 %s382, 127
        %s385 = sadd.s32 %s383, %s35
        %s386 = smul.u32 %s385, 128
        %s387 = sshra.s32 %s382, 7
        %s388 = sand.u32 %s382, 127
        %s389 = sadd.s32 %s386, %s388
        %s390 = sld [smem:[#allocation4 + %s389]]
        %p391 = scmp.gt.s32.totalorder %s390, 0
        %s392 = scalar_select %p391, %s390, 0
        %p393 = scmp.lt.s32.totalorder %s392, 63
        %s394 = scalar_select %p393, %s392, 63
        %s395 = sld [smem:[#allocation5 + %s389]]
        %p396 = scmp.gt.s32.totalorder %s395, 0
        %s397 = scalar_select %p396, %s395, 0
        %p398 = scmp.lt.s32.totalorder %s397, 1
        %s399 = scalar_select %p398, %s397, 1
        %s400 = scalar_lea.vmem [#allocation6], %s394
        %v401 = vld [vmem:[%s400] sm:$0x1]
        %s402 = scalar_lea.vmem %s4, %s399
        %v403 = vld [vmem:[%s402] sm:$0x1]
        %v404 = vadd.f32 %v401, %v403
        %405 = vst [vmem:[#allocation2 + $0x5] sm:$0x1] %v404
        %s406 = sadd.s32 %s262, 6
        %s407 = sshra.s32 %s406, 7
        %s408 = sand.u32 %s406, 127
        %s409 = sadd.s32 %s407, %s35
        %s410 = smul.u32 %s409, 128
        %s411 = sshra.s32 %s406, 7
        %s412 = sand.u32 %s406, 127
        %s413 = sadd.s32 %s410, %s412
        %s414 = sld [smem:[#allocation4 + %s413]]
        %p415 = scmp.gt.s32.totalorder %s414, 0
        %s416 = scalar_select %p415, %s414, 0
        %p417 = scmp.lt.s32.totalorder %s416, 63
        %s418 = scalar_select %p417, %s416, 63
        %s419 = sld [smem:[#allocation5 + %s413]]
        %p420 = scmp.gt.s32.totalorder %s419, 0
        %s421 = scalar_select %p420, %s419, 0
        %p422 = scmp.lt.s32.totalorder %s421, 1
        %s423 = scalar_select %p422, %s421, 1
        %s424 = scalar_lea.vmem [#allocation6], %s418
        %v425 = vld [vmem:[%s424] sm:$0x1]
        %s426 = scalar_lea.vmem %s4, %s423
        %v427 = vld [vmem:[%s426] sm:$0x1]
        %v428 = vadd.f32 %v425, %v427
        %429 = vst [vmem:[#allocation2 + $0x6] sm:$0x1] %v428
        %s430 = sadd.s32 %s262, 7
        %s431 = sshra.s32 %s430, 7
        %s432 = sand.u32 %s430, 127
        %s433 = sadd.s32 %s431, %s35
        %s434 = smul.u32 %s433, 128
        %s435 = sshra.s32 %s430, 7
        %s436 = sand.u32 %s430, 127
        %s437 = sadd.s32 %s434, %s436
        %s438 = sld [smem:[#allocation4 + %s437]]
        %p439 = scmp.gt.s32.totalorder %s438, 0
        %s440 = scalar_select %p439, %s438, 0
        %p441 = scmp.lt.s32.totalorder %s440, 63
        %s442 = scalar_select %p441, %s440, 63
        %s443 = sld [smem:[#allocation5 + %s437]]
        %p444 = scmp.gt.s32.totalorder %s443, 0
        %s445 = scalar_select %p444, %s443, 0
        %p446 = scmp.lt.s32.totalorder %s445, 1
        %s447 = scalar_select %p446, %s445, 1
        %s448 = scalar_lea.vmem [#allocation6], %s442
        %v449 = vld [vmem:[%s448] sm:$0x1]
        %s450 = scalar_lea.vmem %s4, %s447
        %v451 = vld [vmem:[%s450] sm:$0x1]
        %v452 = vadd.f32 %v449, %v451
        %453 = vst [vmem:[#allocation2 + $0x7] sm:$0x1] %v452
        %v454 = vld [vmem:[#allocation2] sm:$0xff]
        %v455 = vld [vmem:[#allocation9] sm:$0xff]
        %v456 = vadd.f32 %v454, %v455
        %457 = vadd.xlane.f32.xlu0 %v456
        %v458 = vpop.xlane.xlu0 %457
        %v459 = vrcp.pop 128.0
        %v460 = vmul.f32 %v458, %v459
        %v461 = vsub.f32 %v456, %v460
        %v462 = vmul.f32 %v461, %v461
        %463 = vadd.xlane.f32.xlu0 %v462
        %v464 = vpop.xlane.xlu0 %463
        %v465 = vmul.f32 %v464, %v459
        %v466 = vadd.f32 %v465, 1e-12
        %v467 = vrsqrt.pop %v466
        %v468 = vmul.f32 %v461, %v467
        %v469 = vld [vmem:[%s5] sm:$0x1]
        %v471 = vlaneseq
        %v472 = vshrl.u32 %v471, 7
        %v473 = vsub.s32 0, %v472
        %v474 = vrot.slane %v469, %v473
        %v476 = vmul.f32 %v468, %v474
        %v477 = vld [vmem:[%s6] sm:$0x1]
        %v479 = vlaneseq
        %v480 = vshrl.u32 %v479, 7
        %v481 = vsub.s32 0, %v480
        %v482 = vrot.slane %v477, %v481
        %v484 = vadd.f32 %v476, %v482
        %485 = vst [vmem:[%s261] sm:$0xff] %v484
        %s486 = sand.u32 %s163, 1
        %s487 = scalar_lea.sflag [#allocation8], %s486
        %s488 = sand.u32 %s163, 1
        %s489 = smul.addr %s488, 8
        %s490 = scalar_lea.vmem [#allocation11], %s489
        // Predicated region
        $region49: #{tpu_custom_call.1} parent=39 // pred_check
          %p491 = pneg %p173
        $region50: #{tpu_custom_call.1} parent=39 // pred_check_branch
          %493 = sbr.rel (%p491) target = $region52
        $region51: #{tpu_custom_call.1} parent=39 // pred_region
          %s495 = ssub.s32 128, 128
          %496 = vsyncadd %s487, %s495
          %s497 = sadd.s32 %s36, %s35
          %s498 = smul.addr %s497, 128
          %s499 = scalar_lea.hbm %s7, %s498
          %s501 = sshll.u32 %s490, 4
          %s502 = int_to_ptr.vmem [resolvable:$true] %s501
          %504 = dma.vmem_to_hbm [thread:$0]  %s502, 128, %s499, %s487
        $region52: #{tpu_custom_call.1} parent=39 // pred_fallthru
          _
      $region40: #{tpu_custom_call.1} parent=5 // pred_fallthru
        _
      %p505 = scmp.le.s32.totalorder 2, %s26
      // Predicated region
      $region53: #{tpu_custom_call.1} parent=5 // pred_check
        %p506 = pneg %p505
      $region54: #{tpu_custom_call.1} parent=5 // pred_check_branch
        %508 = sbr.rel (%p506) target = $region56
      $region55: #{tpu_custom_call.1} parent=5 // pred_region
        %s509 = ssub.s32 %s26, 2
        // Predicated region
        $region57: #{tpu_custom_call.1} parent=55 // pred_check
          %p510 = pneg %p179
        $region58: #{tpu_custom_call.1} parent=55 // pred_check_branch
          %512 = sbr.rel (%p510) target = $region60
        $region59: #{tpu_custom_call.1} parent=55 // pred_region
          %s513 = sand.u32 %s164, 1
          %s514 = scalar_lea.sflag [#allocation8], %s513
          %s515 = sand.u32 %s164, 1
          %s516 = smul.addr %s515, 8
          %s517 = scalar_lea.vmem [#allocation11], %s516
          %518 = dma.done %s514, 128
        $region60: #{tpu_custom_call.1} parent=55 // pred_fallthru
          _
      $region56: #{tpu_custom_call.1} parent=5 // pred_fallthru
        _
    $region6: #{tpu_custom_call.1} parent=1 // loop_footer
      %s30 = sadd.s32 1, %s26
    $region7: #{tpu_custom_call.1} parent=1 // loop_footer_branch
      %25 = sbr.rel target = $region3
    $region8: #{tpu_custom_call.1} parent=1 // loop_exit
      _
    %519 = vsyncpa [#allocation7], 1
    %s520 = scalar_lea.sflag [#allocation7], 1
    %521 = vsyncpa %s520, 1
    %522 = vsyncpa [#allocation10], 1
    %523 = vsyncpa [#allocation8], 1
    %s524 = scalar_lea.sflag [#allocation8], 1
    %525 = vsyncpa %s524, 1

</llo_original>
